<compile_context>
chip_gen: v7x
topology: tpu7x:2x2x1
jax: 0.10.0
libtpu: 0.0.40
codegen_flags: <defaults>
</compile_context>

<pallas_src>
import jax
import jax.numpy as jnp
from jax.experimental import pallas as pl
from jax.experimental.pallas import tpu as pltpu

GAMMA = 1  # self.gamma = 1 in the PyTorch module (integer -> no float pow needed)


# ---------------------------------------------------------------------------
# Fused focal-CE loss + accuracy kernel
# ---------------------------------------------------------------------------
def _make_fused_kernel(TM, M_total):
    def kernel(logits_ref, label_ref, pred_ref, w_ref, out_ref):
        # logits_ref: (C, TM)  source dtype  (class on sublanes, batch on lanes)
        # label_ref : (1, TM)  int32
        # pred_ref  : (1, TM)  int32
        # w_ref     : (1, TM)  float32
        # out_ref   : (3, TM)  float32  rows = [focal*ce, focal, correct]
        x = logits_ref[...].astype(jnp.float32)               # cast in-kernel
        labels = label_ref[...]
        preds = pred_ref[...]
        w = w_ref[...]
        C = x.shape[0]

        # one-hot along the class (sublane) axis — computed once, reused twice
        cls = jax.lax.broadcasted_iota(jnp.int32, (C, TM), 0)
        onehot = (cls == labels).astype(jnp.float32)           # (C, TM)

        # --- l2norm along the class axis: x * rsqrt(sum(x^2)) ---
        sumsq = jnp.sum(x * x, axis=0, keepdims=True)          # (1, TM)
        xn = x * jax.lax.rsqrt(sumsq)

        # --- prob of the label under softmax(l2norm(x)), no full softmax divide ---
        mx = jnp.max(xn, axis=0, keepdims=True)
        ex = jnp.exp(xn - mx)
        ex_lbl = jnp.sum(ex * onehot, axis=0, keepdims=True)
        probs = ex_lbl / jnp.sum(ex, axis=0, keepdims=True)    # (1, TM)

        # --- focal weight, gamma == 1 -> plain subtract (no pow/exp/log) ---
        focal = (1.0 - probs) * w                              # (1, TM)

        # --- CrossEntropyLoss(reduction='none') on the raw logits ---
        mx2 = jnp.max(x, axis=0, keepdims=True)
        lse = mx2 + jnp.log(jnp.sum(jnp.exp(x - mx2), axis=0, keepdims=True))
        x_lbl = jnp.sum(x * onehot, axis=0, keepdims=True)
        ce = lse - x_lbl                                       # (1, TM)

        tf_loss = focal * ce                                   # (1, TM)
        correct = (preds == labels).astype(jnp.float32)        # (1, TM)

        # mask padded lanes (M_total is a static Python int)
        col = jax.lax.broadcasted_iota(jnp.int32, (1, TM), 1) + pl.program_id(0) * TM
        valid = col < M_total
        zero = jnp.zeros_like(tf_loss)
        out_ref[...] = jnp.concatenate(
            [jnp.where(valid, tf_loss, zero),
             jnp.where(valid, focal, zero),
             jnp.where(valid, correct, zero)],
            axis=0,
        )

    return kernel


def _round_up(x, m):
    return ((x + m - 1) // m) * m


def _fused_loss_acc(logits, label, pred, weight=None, tm=512):
    """Returns (loss, accuracy). logits: (..., C); label/pred: (...,)."""
    C = logits.shape[-1]
    logits2 = logits.reshape(-1, C)                    # keep source dtype (e.g. bf16)
    label2 = label.reshape(-1).astype(jnp.int32)
    pred2 = pred.reshape(-1).astype(jnp.int32)
    M = logits2.shape[0]
    if weight is None:
        w2 = jnp.ones((M,), jnp.float32)
    else:
        w2 = weight.reshape(-1).astype(jnp.float32)

    TM = min(tm, _round_up(M, 128))                    # lane tile (multiple of 128)
    M_pad = _round_up(M, TM)
    grid = M_pad // TM
    pad = M_pad - M

    # lane-dense, transposed layout (class -> sublanes, batch -> lanes)
    logits_t = jnp.pad(logits2, ((0, pad), (0, 0)), constant_values=1).T   # (C, M_pad)
    label_p = jnp.pad(label2, (0, pad)).reshape(1, M_pad)
    pred_p = jnp.pad(pred2, (0, pad), constant_values=-1).reshape(1, M_pad)
    w_p = jnp.pad(w2, (0, pad)).reshape(1, M_pad)

    parts = pl.pallas_call(
        _make_fused_kernel(TM, M),
        out_shape=jax.ShapeDtypeStruct((3, M_pad), jnp.float32),
        grid_spec=pltpu.PrefetchScalarGridSpec(
            num_scalar_prefetch=0,
            grid=(grid,),
            in_specs=[
                pl.BlockSpec((C, TM), lambda i: (0, i)),
                pl.BlockSpec((1, TM), lambda i: (0, i)),
                pl.BlockSpec((1, TM), lambda i: (0, i)),
                pl.BlockSpec((1, TM), lambda i: (0, i)),
            ],
            out_specs=pl.BlockSpec((3, TM), lambda i: (0, i)),
        ),
        compiler_params=pltpu.CompilerParams(dimension_semantics=("parallel",)),
    )(logits_t, label_p, pred_p, w_p)

    num = jnp.sum(parts[0])
    den = jnp.sum(parts[1])
    loss = num / den                                   # reduction == 'mean'
    acc = jnp.sum(parts[2]) / jnp.float32(M)
    return loss, acc


def loss_and_accuracy(logits, label, pred, weight=None):
    """Fused single-launch path: FewShotREModel.loss + FewShotREModel.accuracy."""
    return _fused_loss_acc(logits, label, pred, weight)


def focal_ce_loss(logits, label, weight=None):
    """FewShotREModel.loss (reduction='mean')."""
    dummy_pred = jnp.zeros(label.shape, jnp.int32)
    loss, _ = _fused_loss_acc(logits, label, dummy_pred, weight)
    return loss


def accuracy(pred, label):
    """FewShotREModel.accuracy. Trivial work -> plain jnp (per perf review a
    standalone pallas_call here is pure launch/DMA overhead); the Pallas path
    is the fused loss_and_accuracy kernel above."""
    return jnp.mean((pred.reshape(-1) == label.reshape(-1)).astype(jnp.float32))


# ---------------------------------------------------------------------------
# Pure-JAX reference (mirrors the PyTorch code path) for correctness checks
# ---------------------------------------------------------------------------
def _ref_loss(logits, label, weight=None):
    C = logits.shape[-1]
    logits2 = logits.reshape(-1, C).astype(jnp.float32)
    label2 = label.reshape(-1)
    norm = jnp.sqrt(jnp.sum(logits2 ** 2, axis=-1, keepdims=True))
    xn = logits2 / norm
    sm = jax.nn.softmax(xn, axis=-1)
    idx = jnp.arange(logits2.shape[0])
    probs = sm[idx, label2]
    focal = (1.0 - probs) ** GAMMA
    if weight is not None:
        focal = focal * weight.reshape(-1).astype(jnp.float32)
    ce = -jax.nn.log_softmax(logits2, axis=-1)[idx, label2]
    tf = focal * ce
    return jnp.sum(tf / jnp.sum(focal))


# TODO(synk): FewShotREModel.forward raises NotImplementedError in the source
# (sentence_encoder is an injected sub-module), so only loss/l2norm/accuracy
# are implemented here.

if __name__ == "__main__":
    key = jax.random.PRNGKey(0)
    k1, k2, k3, k4, k5 = jax.random.split(key, 5)

    # Small shapes consistent with the module: B=2, total_Q=8, N=5 classes.
    B, total_Q, N = 2, 8, 5
    logits = jax.random.normal(k1, (B, total_Q, N), dtype=jnp.float32)
    label = jax.random.randint(k2, (B, total_Q), 0, N, dtype=jnp.int32)
    pred = jnp.argmax(logits, axis=-1).astype(jnp.int32)

    loss, acc = jax.block_until_ready(loss_and_accuracy(logits, label, pred))
    ref_l = _ref_loss(logits, label)
    ref_a = jnp.mean((pred.reshape(-1) == label.reshape(-1)).astype(jnp.float32))
    assert jnp.allclose(loss, ref_l, rtol=1e-5, atol=1e-5), (loss, ref_l)
    assert jnp.allclose(acc, ref_a, rtol=1e-6, atol=1e-6), (acc, ref_a)

    # Optional per-example weight path.
    w = jax.random.uniform(k3, (B, total_Q), dtype=jnp.float32) + 0.5
    loss_w = jax.block_until_ready(focal_ce_loss(logits, label, weight=w))
    ref_w = _ref_loss(logits, label, weight=w)
    assert jnp.allclose(loss_w, ref_w, rtol=1e-5, atol=1e-5), (loss_w, ref_w)

    # bf16 logits: no wrapper-side cast, cast happens inside the kernel.
    logits_bf = jax.random.normal(k4, (B, total_Q, N), dtype=jnp.float32).astype(jnp.bfloat16)
    loss_bf = jax.block_until_ready(focal_ce_loss(logits_bf, label))
    ref_bf = _ref_loss(logits_bf, label)
    assert jnp.allclose(loss_bf, ref_bf, rtol=1e-4, atol=1e-4), (loss_bf, ref_bf)

    # Multi-tile + padded-lane case (M=600 -> TM=512, grid=2, 424 padded lanes).
    B2, Q2 = 3, 200
    logits2 = jax.random.normal(k5, (B2, Q2, N), dtype=jnp.float32)
    label2 = jax.random.randint(k2, (B2, Q2), 0, N, dtype=jnp.int32)
    pred2 = jnp.argmax(logits2, axis=-1).astype(jnp.int32)
    loss2, acc2 = jax.block_until_ready(loss_and_accuracy(logits2, label2, pred2))
    assert jnp.allclose(loss2, _ref_loss(logits2, label2), rtol=1e-5, atol=1e-5)
    ref_a2 = jnp.mean((pred2.reshape(-1) == label2.reshape(-1)).astype(jnp.float32))
    assert jnp.allclose(acc2, ref_a2, rtol=1e-6, atol=1e-6)

    # Standalone accuracy API (plain jnp).
    assert jnp.allclose(accuracy(pred, label), ref_a)

    print("KERNEL_OK")
</pallas_src>

<mosaic_0001>
module attributes {stable_mosaic.version = 11 : i64} {
  func.func @kernel(%arg0: i32, %arg1: memref<5x128xf32, #tpu.memory_space<vmem>>, %arg2: memref<1x128xi32, #tpu.memory_space<vmem>>, %arg3: memref<1x128xi32, #tpu.memory_space<vmem>>, %arg4: memref<1x128xf32, #tpu.memory_space<vmem>>, %arg5: memref<3x128xf32, #tpu.memory_space<vmem>>) attributes {dimension_semantics = [#tpu.dimension_semantics<parallel>], iteration_bounds = array<i64: 1>, scalar_prefetch = 0 : i64, scratch_operands = 0 : i64, tpu.core_type = #tpu.core_type<tc>, window_params = [{transform_indices = @transform_0, window_bounds = array<i64: 5, 128>}, {transform_indices = @transform_1, window_bounds = array<i64: 1, 128>}, {transform_indices = @transform_2, window_bounds = array<i64: 1, 128>}, {transform_indices = @transform_3, window_bounds = array<i64: 1, 128>}, {transform_indices = @transform_4, window_bounds = array<i64: 3, 128>}]} {
    %c0 = arith.constant 0 : index
    %c0_0 = arith.constant 0 : index
    %0 = vector.load %arg1[%c0, %c0_0] : memref<5x128xf32, #tpu.memory_space<vmem>>, vector<5x128xf32>
    %c0_1 = arith.constant 0 : index
    %c0_2 = arith.constant 0 : index
    %1 = vector.load %arg2[%c0_1, %c0_2] : memref<1x128xi32, #tpu.memory_space<vmem>>, vector<1x128xi32>
    %c0_3 = arith.constant 0 : index
    %c0_4 = arith.constant 0 : index
    %2 = vector.load %arg3[%c0_3, %c0_4] : memref<1x128xi32, #tpu.memory_space<vmem>>, vector<1x128xi32>
    %c0_5 = arith.constant 0 : index
    %c0_6 = arith.constant 0 : index
    %3 = vector.load %arg4[%c0_5, %c0_6] : memref<1x128xf32, #tpu.memory_space<vmem>>, vector<1x128xf32>
    %4 = tpu.iota {dimensions = array<i32: 0>} : vector<5x128xi32>
    %5 = vector.broadcast %1 : vector<1x128xi32> to vector<5x128xi32>
    %6 = arith.cmpi eq, %4, %5 : vector<5x128xi32>
    %7 = arith.extui %6 : vector<5x128xi1> to vector<5x128xi32>
    %8 = arith.sitofp %7 : vector<5x128xi32> to vector<5x128xf32>
    %9 = arith.mulf %0, %0 : vector<5x128xf32>
    %cst = arith.constant dense<0.000000e+00> : vector<128xf32>
    %10 = vector.multi_reduction <add>, %9, %cst [0] : vector<5x128xf32> to vector<128xf32>
    %11 = vector.shape_cast %10 : vector<128xf32> to vector<1x128xf32>
    %12 = math.rsqrt %11 : vector<1x128xf32>
    %13 = vector.broadcast %12 : vector<1x128xf32> to vector<5x128xf32>
    %14 = arith.mulf %0, %13 : vector<5x128xf32>
    %cst_7 = arith.constant dense<0xFF800000> : vector<128xf32>
    %15 = vector.multi_reduction <maximumf>, %14, %cst_7 [0] : vector<5x128xf32> to vector<128xf32>
    %16 = vector.shape_cast %15 : vector<128xf32> to vector<1x128xf32>
    %17 = vector.broadcast %16 : vector<1x128xf32> to vector<5x128xf32>
    %18 = arith.subf %14, %17 : vector<5x128xf32>
    %19 = math.exp %18 : vector<5x128xf32>
    %20 = arith.mulf %19, %8 : vector<5x128xf32>
    %cst_8 = arith.constant dense<0.000000e+00> : vector<128xf32>
    %21 = vector.multi_reduction <add>, %20, %cst_8 [0] : vector<5x128xf32> to vector<128xf32>
    %22 = vector.shape_cast %21 : vector<128xf32> to vector<1x128xf32>
    %cst_9 = arith.constant dense<0.000000e+00> : vector<128xf32>
    %23 = vector.multi_reduction <add>, %19, %cst_9 [0] : vector<5x128xf32> to vector<128xf32>
    %24 = vector.shape_cast %23 : vector<128xf32> to vector<1x128xf32>
    %25 = arith.divf %22, %24 : vector<1x128xf32>
    %cst_10 = arith.constant 1.000000e+00 : f32
    %26 = vector.broadcast %cst_10 : f32 to vector<1x128xf32>
    %27 = arith.subf %26, %25 : vector<1x128xf32>
    %28 = arith.mulf %27, %3 : vector<1x128xf32>
    %cst_11 = arith.constant dense<0xFF800000> : vector<128xf32>
    %29 = vector.multi_reduction <maximumf>, %0, %cst_11 [0] : vector<5x128xf32> to vector<128xf32>
    %30 = vector.shape_cast %29 : vector<128xf32> to vector<1x128xf32>
    %31 = vector.broadcast %30 : vector<1x128xf32> to vector<5x128xf32>
    %32 = arith.subf %0, %31 : vector<5x128xf32>
    %33 = math.exp %32 : vector<5x128xf32>
    %cst_12 = arith.constant dense<0.000000e+00> : vector<128xf32>
    %34 = vector.multi_reduction <add>, %33, %cst_12 [0] : vector<5x128xf32> to vector<128xf32>
    %35 = vector.shape_cast %34 : vector<128xf32> to vector<1x128xf32>
    %36 = math.log %35 : vector<1x128xf32>
    %37 = arith.addf %30, %36 : vector<1x128xf32>
    %38 = arith.mulf %0, %8 : vector<5x128xf32>
    %cst_13 = arith.constant dense<0.000000e+00> : vector<128xf32>
    %39 = vector.multi_reduction <add>, %38, %cst_13 [0] : vector<5x128xf32> to vector<128xf32>
    %40 = vector.shape_cast %39 : vector<128xf32> to vector<1x128xf32>
    %41 = arith.subf %37, %40 : vector<1x128xf32>
    %42 = arith.mulf %28, %41 : vector<1x128xf32>
    %43 = arith.cmpi eq, %2, %1 : vector<1x128xi32>
    %44 = arith.extui %43 : vector<1x128xi1> to vector<1x128xi32>
    %45 = arith.sitofp %44 : vector<1x128xi32> to vector<1x128xf32>
    %46 = tpu.iota {dimensions = array<i32: 1>} : vector<1x128xi32>
    %c128_i32 = arith.constant 128 : i32
    %47 = arith.muli %arg0, %c128_i32 : i32
    %48 = vector.broadcast %47 : i32 to vector<1x128xi32>
    %49 = arith.addi %46, %48 : vector<1x128xi32>
    %c16_i32 = arith.constant 16 : i32
    %50 = vector.broadcast %c16_i32 : i32 to vector<1x128xi32>
    %51 = arith.cmpi slt, %49, %50 : vector<1x128xi32>
    %cst_14 = arith.constant 0.000000e+00 : f32
    %52 = vector.broadcast %cst_14 : f32 to vector<1x128xf32>
    %53 = arith.select %51, %42, %52 : vector<1x128xi1>, vector<1x128xf32>
    %54 = arith.select %51, %28, %52 : vector<1x128xi1>, vector<1x128xf32>
    %55 = arith.select %51, %45, %52 : vector<1x128xi1>, vector<1x128xf32>
    %56 = tpu.concatenate %53, %54, %55 in 0 : vector<1x128xf32>, vector<1x128xf32>, vector<1x128xf32> -> vector<3x128xf32>
    %c0_15 = arith.constant 0 : index
    %c0_16 = arith.constant 0 : index
    %57 = vector.load %arg5[%c0_15, %c0_16] : memref<3x128xf32, #tpu.memory_space<vmem>>, vector<3x128xf32>
    tpu.vector_store %arg5[%c0_15, %c0_16], %56 {strides = array<i32>} : memref<3x128xf32, #tpu.memory_space<vmem>>, vector<3x128xf32>,
    return
  }
  func.func @transform_0(%arg0: i32) -> (i32, i32) {
    %c0_i32 = arith.constant 0 : i32
    %c0_i32_0 = arith.constant 0 : i32
    return %c0_i32, %arg0 : i32, i32
  }
  func.func @transform_1(%arg0: i32) -> (i32, i32) {
    %c0_i32 = arith.constant 0 : i32
    %c0_i32_0 = arith.constant 0 : i32
    return %c0_i32, %arg0 : i32, i32
  }
  func.func @transform_2(%arg0: i32) -> (i32, i32) {
    %c0_i32 = arith.constant 0 : i32
    %c0_i32_0 = arith.constant 0 : i32
    return %c0_i32, %arg0 : i32, i32
  }
  func.func @transform_3(%arg0: i32) -> (i32, i32) {
    %c0_i32 = arith.constant 0 : i32
    %c0_i32_0 = arith.constant 0 : i32
    return %c0_i32, %arg0 : i32, i32
  }
  func.func @transform_4(%arg0: i32) -> (i32, i32) {
    %c0_i32 = arith.constant 0 : i32
    %c0_i32_0 = arith.constant 0 : i32
    return %c0_i32, %arg0 : i32, i32
  }
}

</mosaic_0001>

<llo_original>
// kernel: tpu_custom_call.1
$region0: #{tpu_custom_call.1}
  #allocation0 [shape = 'u32[]', space=smem, size = 0x4, offset = 0x4, fixed_abs, tag = 'smem constant byte address 0x4 - core index']
  #allocation1 [shape = 'u32[144,128]{1,0:T(1,128)}', space=vmem, size = 0x12000, scoped, tag = 'internal scratch']
  %s0 = inlined_call_operand.hbm [shape: f32[5,128], index: 0, kind: input, shape index: {}]
  %s1 = inlined_call_operand.vmem [shape: s32[1,128], index: 1, kind: input, shape index: {}]
  %s2 = inlined_call_operand.vmem [shape: s32[1,128], index: 2, kind: input, shape index: {}]
  %s3 = inlined_call_operand.vmem [shape: f32[1,128], index: 3, kind: input, shape index: {}]
  %s4 = inlined_call_operand.hbm [shape: f32[3,128], index: 4, kind: output, shape index: {}]
  %s5 = sld [smem:[#allocation0]]
  $region30: #{tpu_custom_call.1} parent=0
    _
  %s7 = ssub.s32 1, %s5
  %s8 = scalar_select 0, %s7, %s5
  $region1: #{tpu_custom_call.1} parent=0
    #allocation2 [shape = 'u8[4096]{0}', space=vmem, size = 0x1000, scoped, tag = 'input window, operand 0, single buffered']
    #allocation3 [shape = 's32[1]{0}', space=sflag, size = 0x4, scoped, tag = 'scoped memory for tpu_custom_call.1']
    #allocation4 [shape = 's32[1]{0}', space=sflag, size = 0x4, scoped, tag = 'scoped memory for tpu_custom_call.1']
    #allocation5 [shape = 'u8[2048]{0}', space=vmem, size = 0x800, scoped, tag = 'output window, operand 0, single buffered']
    %9 = vsyncpa [#allocation3], 0
    %10 = vsyncpa [#allocation4], 0
    // Predicated region
    $region2: #{tpu_custom_call.1} parent=1 // pred_check
      _
    $region3: #{tpu_custom_call.1} parent=1 // pred_check_branch
      %12 = sbr.rel (0) target = $region5
    $region4: #{tpu_custom_call.1} parent=1 // pred_region
      %s14 = ssub.s32 128, 128
      %15 = vsyncadd [#allocation3], %s14
      %s17 = sshll.u32 [#allocation2], 4
      %s18 = int_to_ptr.vmem [resolvable:$true] %s17
      %20 = dma.hbm_to_vmem [thread:$0]  %s0, 128, %s18, [#allocation3]
    $region5: #{tpu_custom_call.1} parent=1 // pred_fallthru
      _
    // Predicated region
    $region6: #{tpu_custom_call.1} parent=1 // pred_check
      _
    $region7: #{tpu_custom_call.1} parent=1 // pred_check_branch
      %22 = sbr.rel (0) target = $region9
    $region8: #{tpu_custom_call.1} parent=1 // pred_region
      _
    $region9: #{tpu_custom_call.1} parent=1 // pred_fallthru
      _
    // Predicated region
    $region10: #{tpu_custom_call.1} parent=1 // pred_check
      _
    $region11: #{tpu_custom_call.1} parent=1 // pred_check_branch
      %24 = sbr.rel (0) target = $region13
    $region12: #{tpu_custom_call.1} parent=1 // pred_region
      _
    $region13: #{tpu_custom_call.1} parent=1 // pred_fallthru
      _
    // Predicated region
    $region14: #{tpu_custom_call.1} parent=1 // pred_check
      _
    $region15: #{tpu_custom_call.1} parent=1 // pred_check_branch
      %26 = sbr.rel (0) target = $region17
    $region16: #{tpu_custom_call.1} parent=1 // pred_region
      _
    $region17: #{tpu_custom_call.1} parent=1 // pred_fallthru
      _
    // Predicated region
    $region18: #{tpu_custom_call.1} parent=1 // pred_check
      _
    $region19: #{tpu_custom_call.1} parent=1 // pred_check_branch
      %28 = sbr.rel (0) target = $region21
    $region20: #{tpu_custom_call.1} parent=1 // pred_region
      %29 = dma.done [#allocation3], 128
    $region21: #{tpu_custom_call.1} parent=1 // pred_fallthru
      _
    %v30 = vld [vmem:[#allocation2] sm:$0x1f]
    %v31 = vld [vmem:[%s1] sm:$0x1]
    %v32 = vld [vmem:[%s2] sm:$0x1]
    %v33 = vld [vmem:[%s3] sm:$0x1]
    %v34 = vlaneseq
    %v35 = vshrl.u32 %v34, 7
    %v36 = vlaneseq
    %v37 = vshrl.u32 %v36, 7
    %v38 = vsub.s32 0, %v37
    %v39 = vrot.slane %v31, %v38
    %vm40 = vcmp.eq.s32.totalorder %v35, %v39
    %v41 = vsel %vm40, 1, 0
    %v42 = vcvt.s32.f32 %v41
    %v43 = vmul.f32 %v30, %v30
    %vm44 = vcmask 1044480
    %v45 = vsel %vm44, %v43, 0.0
    %v46 = vrot.slane %v45, 4
    %v47 = vadd.f32 %v45, %v46
    %v48 = vrot.slane %v47, 2
    %v49 = vadd.f32 %v47, %v48
    %v50 = vrot.slane %v49, 1
    %v51 = vadd.f32 %v49, %v50
    %v52 = vrsqrt.pop %v51
    %v53 = vmul.f32 %v30, %v52
    %v54 = vsel %vm44, %v53, -inf
    %v55 = vrot.slane %v54, 4
    %v56 = vmax.f32 %v54, %v55
    %v57 = vrot.slane %v56, 2
    %v58 = vmax.f32 %v56, %v57
    %v59 = vrot.slane %v58, 1
    %v60 = vmax.f32 %v58, %v59
    %v61 = vsub.f32 %v53, %v60
    %v62 = vmul.f32 %v61, 1.442695
    %v63 = vpow.pop %v62
    %v64 = vmul.f32 %v63, %v42
    %v65 = vsel %vm44, %v64, 0.0
    %v66 = vrot.slane %v65, 4
    %v67 = vadd.f32 %v65, %v66
    %v68 = vrot.slane %v67, 2
    %v69 = vadd.f32 %v67, %v68
    %v70 = vrot.slane %v69, 1
    %v71 = vadd.f32 %v69, %v70
    %v72 = vsel %vm44, %v63, 0.0
    %v73 = vrot.slane %v72, 4
    %v74 = vadd.f32 %v72, %v73
    %v75 = vrot.slane %v74, 2
    %v76 = vadd.f32 %v74, %v75
    %v77 = vrot.slane %v76, 1
    %v78 = vadd.f32 %v76, %v77
    %v79 = vrcp.pop %v78
    %v80 = vmul.f32 %v71, %v79
    %v81 = vsub.f32 1.0, %v80
    %v82 = vmul.f32 %v81, %v33
    %v83 = vsel %vm44, %v30, -inf
    %v84 = vrot.slane %v83, 4
    %v85 = vmax.f32 %v83, %v84
    %v86 = vrot.slane %v85, 2
    %v87 = vmax.f32 %v85, %v86
    %v88 = vrot.slane %v87, 1
    %v89 = vmax.f32 %v87, %v88
    %v90 = vsub.f32 %v30, %v89
    %v91 = vmul.f32 %v90, 1.442695
    %v92 = vpow.pop %v91
    %v93 = vsel %vm44, %v92, 0.0
    %v94 = vrot.slane %v93, 4
    %v95 = vadd.f32 %v93, %v94
    %v96 = vrot.slane %v95, 2
    %v97 = vadd.f32 %v95, %v96
    %v98 = vrot.slane %v97, 1
    %v99 = vadd.f32 %v97, %v98
    %v100 = vlog2.pop %v99
    %v101 = vmul.f32 %v100, 0.6931472
    %v102 = vadd.f32 %v89, %v101
    %v103 = vmul.f32 %v30, %v42
    %v104 = vsel %vm44, %v103, 0.0
    %v105 = vrot.slane %v104, 4
    %v106 = vadd.f32 %v104, %v105
    %v107 = vrot.slane %v106, 2
    %v108 = vadd.f32 %v106, %v107
    %v109 = vrot.slane %v108, 1
    %v110 = vadd.f32 %v108, %v109
    %v111 = vsub.f32 %v102, %v110
    %v112 = vmul.f32 %v82, %v111
    %vm113 = vcmp.eq.s32.totalorder %v32, %v31
    %v114 = vsel %vm113, 1, 0
    %v115 = vcvt.s32.f32 %v114
    %v116 = vlaneseq
    %v117 = vand.u32 %v116, 127
    %s118 = smul.u32 0, 128
    %v119 = vstv %s118
    %v120 = vadd.s32 %v117, %v119
    %vm121 = vcmp.lt.s32.totalorder %v120, 16
    %v122 = vsel %vm121, %v112, 0.0
    %v123 = vsel %vm121, %v82, 0.0
    %v124 = vsel %vm121, %v115, 0.0
    %v126 = vrot.slane %v123, 7
    %v129 = vrot.slane %v124, 6
    %vm131 = vcmask 1040384
    %v132 = vsel %vm131, %v122, %v126
    %vm133 = vcmask 1041408
    %v134 = vsel %vm133, %v132, %v129
    %135 = vst [vmem:[#allocation5] sm:$0x7] %v134
    // Predicated region
    $region22: #{tpu_custom_call.1} parent=1 // pred_check
      _
    $region23: #{tpu_custom_call.1} parent=1 // pred_check_branch
      %137 = sbr.rel (0) target = $region25
    $region24: #{tpu_custom_call.1} parent=1 // pred_region
      %s139 = ssub.s32 64, 64
      %140 = vsyncadd [#allocation4], %s139
      %s142 = sshll.u32 [#allocation5], 4
      %s143 = int_to_ptr.vmem [resolvable:$true] %s142
      %145 = dma.vmem_to_hbm [thread:$0]  %s143, 64, %s4, [#allocation4]
    $region25: #{tpu_custom_call.1} parent=1 // pred_fallthru
      _
    // Predicated region
    $region26: #{tpu_custom_call.1} parent=1 // pred_check
      _
    $region27: #{tpu_custom_call.1} parent=1 // pred_check_branch
      %147 = sbr.rel (0) target = $region29
    $region28: #{tpu_custom_call.1} parent=1 // pred_region
      %148 = dma.done [#allocation4], 64
    $region29: #{tpu_custom_call.1} parent=1 // pred_fallthru
      _
    %149 = vsyncpa [#allocation3], 1
    %150 = vsyncpa [#allocation4], 1

</llo_original>
